<compile_context>
chip_gen: v7x
topology: tpu7x:2x2x1
jax: 0.10.0
libtpu: 0.0.40
codegen_flags: <defaults>
</compile_context>

<pallas_src>
import jax
import jax.numpy as jnp
from jax.experimental import pallas as pl
from jax.experimental.pallas import tpu as pltpu

SIZE_H = 60
SIZE_W = SIZE_H * 2          # 120
PLANE = SIZE_H * SIZE_W      # 7200


def unflatten(x: jax.Array, n_channels: int) -> jax.Array:
    """Production path: the .view is a pure metadata reshape (zero HBM traffic)."""
    B, D = x.shape
    assert D == n_channels * PLANE, (
        f"input feature dim {D} != n_channels*60*120 = {n_channels * PLANE}")
    return x.reshape(B, n_channels, SIZE_H, SIZE_W)


def _dma_copy_kernel(x_hbm, o_hbm, sem):
    # One contiguous HBM->HBM DMA per grid step (per chunk). No VMEM roundtrip,
    # no vector ops, no tiling constraints — just the memory system.
    i = pl.program_id(0)
    cp = pltpu.make_async_copy(x_hbm.at[i], o_hbm.at[i], sem)
    cp.start()
    cp.wait()


def unflatten_pallas(x: jax.Array, n_channels: int) -> jax.Array:
    """Pallas copy / fusion-anchor path for UnFlatten.forward.

    x: (B, n_channels * 60 * 120), any dtype (assumed contiguous row-major —
       a non-default upstream layout would make the wrapper reshape non-free).
    returns: (B, n_channels, 60, 120), same dtype, same row-major byte layout
             as PyTorch's .view, materialized in a fresh buffer via HBM->HBM DMA.
    """
    B, D = x.shape
    assert D == n_channels * PLANE, (
        f"input feature dim {D} != n_channels*60*120 = {n_channels * PLANE}")

    itemsize = jnp.dtype(x.dtype).itemsize
    n_elems = B * D
    # Two chunks so the "parallel" grid axis can be sharded across v7x's two
    # TensorCores; always valid since PLANE (7200) is even.
    n_chunks = 2 if n_elems % 2 == 0 else 1
    chunk = n_elems // n_chunks

    flat = pl.pallas_call(
        _dma_copy_kernel,
        out_shape=jax.ShapeDtypeStruct((n_chunks, chunk), x.dtype),
        grid=(n_chunks,),
        in_specs=[pl.BlockSpec(memory_space=pl.ANY)],   # raw HBM ref, no auto-DMA
        out_specs=pl.BlockSpec(memory_space=pl.ANY),    # raw HBM ref, written via DMA
        scratch_shapes=[pltpu.SemaphoreType.DMA],
        compiler_params=pltpu.CompilerParams(
            dimension_semantics=("parallel",)),
        cost_estimate=pl.CostEstimate(
            flops=0, transcendentals=0,
            bytes_accessed=2 * n_elems * itemsize),
    )(x.reshape(n_chunks, chunk))   # zero-cost row-major metadata view

    return flat.reshape(B, n_channels, SIZE_H, SIZE_W)


if __name__ == "__main__":
    key = jax.random.PRNGKey(0)

    # Case 1: B*C divisible by 2 and 4.
    B, C = 2, 4
    x = jax.random.normal(key, (B, C * PLANE), dtype=jnp.float32)
    out = jax.block_until_ready(unflatten_pallas(x, C))
    ref = jnp.reshape(x, (B, C, SIZE_H, SIZE_W))
    assert out.shape == (B, C, SIZE_H, SIZE_W), out.shape
    assert out.dtype == x.dtype, out.dtype
    assert jnp.array_equal(out, ref), "Pallas UnFlatten mismatch (case 1)"
    assert jnp.array_equal(unflatten(x, C), ref), "reshape path mismatch (case 1)"

    # Case 2: smallest case (B*C = 1) — previously hit the awkward 900-lane
    # fallback; with the HBM->HBM DMA there are no layout constraints at all.
    B2, C2 = 1, 1
    x2 = jax.random.normal(jax.random.PRNGKey(0), (B2, C2 * PLANE),
                           dtype=jnp.float32)
    out2 = jax.block_until_ready(unflatten_pallas(x2, C2))
    ref2 = jnp.reshape(x2, (B2, C2, SIZE_H, SIZE_W))
    assert out2.shape == (B2, C2, SIZE_H, SIZE_W), out2.shape
    assert jnp.array_equal(out2, ref2), "Pallas UnFlatten mismatch (case 2)"

    # Case 3: bf16 dtype (no sublane-packing concerns on the DMA path).
    x3 = jax.random.normal(jax.random.PRNGKey(1), (2, 2 * PLANE),
                           dtype=jnp.bfloat16)
    out3 = jax.block_until_ready(unflatten_pallas(x3, 2))
    ref3 = jnp.reshape(x3, (2, 2, SIZE_H, SIZE_W))
    assert jnp.array_equal(out3, ref3), "Pallas UnFlatten mismatch (case 3)"

    print("KERNEL_OK")
</pallas_src>

<mosaic_0001>
module attributes {stable_mosaic.version = 11 : i64} {
  func.func @_dma_copy_kernel(%arg0: i32, %arg1: memref<2x28800xf32, #tpu.memory_space<any>>, %arg2: memref<2x28800xf32, #tpu.memory_space<any>>, %arg3: memref<!tpu.dma_semaphore, #tpu.memory_space<semaphore_mem>>) attributes {dimension_semantics = [#tpu.dimension_semantics<parallel>], iteration_bounds = array<i64: 2>, scalar_prefetch = 0 : i64, scratch_operands = 1 : i64, tpu.core_type = #tpu.core_type<tc>, window_params = [{}, {}]} {
    %c0_i32 = arith.constant 0 : i32
    %0 = tpu.memref_slice %arg1[%arg0, %c0_i32] : memref<2x28800xf32, #tpu.memory_space<any>> -> memref<1x28800xf32, #tpu.memory_space<any>>
    %1 = tpu.memref_squeeze %0 : memref<1x28800xf32, #tpu.memory_space<any>> -> memref<28800xf32, #tpu.memory_space<any>>
    %c0_i32_0 = arith.constant 0 : i32
    %2 = tpu.memref_slice %arg2[%arg0, %c0_i32_0] : memref<2x28800xf32, #tpu.memory_space<any>> -> memref<1x28800xf32, #tpu.memory_space<any>>
    %3 = tpu.memref_squeeze %2 : memref<1x28800xf32, #tpu.memory_space<any>> -> memref<28800xf32, #tpu.memory_space<any>>
    tpu.enqueue_dma source(%1 : memref<28800xf32, #tpu.memory_space<any>>) target(%3 : memref<28800xf32, #tpu.memory_space<any>>) target_semaphore(%arg3 : memref<!tpu.dma_semaphore, #tpu.memory_space<semaphore_mem>>)
    %c0_i32_1 = arith.constant 0 : i32
    %4 = tpu.memref_slice %arg1[%arg0, %c0_i32_1] : memref<2x28800xf32, #tpu.memory_space<any>> -> memref<1x28800xf32, #tpu.memory_space<any>>
    %5 = tpu.memref_squeeze %4 : memref<1x28800xf32, #tpu.memory_space<any>> -> memref<28800xf32, #tpu.memory_space<any>>
    %c0_i32_2 = arith.constant 0 : i32
    %6 = tpu.memref_slice %arg2[%arg0, %c0_i32_2] : memref<2x28800xf32, #tpu.memory_space<any>> -> memref<1x28800xf32, #tpu.memory_space<any>>
    %7 = tpu.memref_squeeze %6 : memref<1x28800xf32, #tpu.memory_space<any>> -> memref<28800xf32, #tpu.memory_space<any>>
    tpu.wait_dma2 semaphore(%arg3 : memref<!tpu.dma_semaphore, #tpu.memory_space<semaphore_mem>>) src(%5 : memref<28800xf32, #tpu.memory_space<any>>) dst(%7 : memref<28800xf32, #tpu.memory_space<any>>)
    return
  }
}

</mosaic_0001>

<llo_original>
// kernel: tpu_custom_call.1
$region0: #{tpu_custom_call.1}
  #allocation0 [shape = 'u32[]', space=smem, size = 0x4, offset = 0x4, fixed_abs, tag = 'smem constant byte address 0x4 - core index']
  #allocation1 [shape = 'u32[144,128]{1,0:T(1,128)}', space=vmem, size = 0x12000, scoped, tag = 'internal scratch']
  #allocation2 [shape = 's32[1]{0}', space=sflag, size = 0x4, scoped, tag = 'scratch operand']
  #allocation3 [shape = 's32[]', space=sflag, size = 0x4, offset = 0, fixed_abs, tag = 'sflag constant byte address 0x0 - dummy sync flag']
  %s0 = inlined_call_operand.hbm [shape: f32[2,28800], index: 0, kind: input, shape index: {}]
  %s1 = inlined_call_operand.hbm [shape: f32[2,28800], index: 1, kind: output, shape index: {}]
  %s2 = sld [smem:[#allocation0]]
  $region9: #{tpu_custom_call.1} parent=0
    _
  %s4 = ssub.s32 1, %s2
  %s5 = scalar_select 0, %s4, %s2
  loop: start=0, step=1, limit=2
  $region2: #{tpu_custom_call.1} parent=0 // loop_pre_header
    _
  $region3: #{tpu_custom_call.1} parent=0 // loop_header
    %s7 = sphi 0, %s11
    %p8 = scmp.ge.s32.totalorder %s7, 2
  $region4: #{tpu_custom_call.1} parent=0 // loop_header_branch
    %10 = sbr.rel (%p8) target = $region8
  $region5: #{tpu_custom_call.1} parent=0 // loop_body
    #allocation4 [shape = 'u32[3]{0}', space=smem, size = 0xc, scoped, tag = 'DMA stride descriptor']
    %s12 = sadd.s32 %s7, 1
    %s13 = sshrl.u32 %s7, 1
    %s14 = sand.u32 %s7, 1
    %s15 = smul.u32 %s13, 450
    %s16 = sadd.s32 %s14, %s15
    %s17 = smul.addr %s16, 16
    %s18 = scalar_lea.hbm %s0, %s17
    %s19 = smul.addr %s16, 16
    %s20 = scalar_lea.hbm %s1, %s19
    %s22 = sshll.u32 1, 14
    %s23 = sxor.u32 4294967295, %s22
    %s26 = sshll.u32 3, 24
    %s27 = sxor.u32 4294967295, %s26
    %s28 = sand.u32 0, %s27
    %s30 = sor.u32 %s28, 0
    %33 = sst [smem:[#allocation4]] 32
    %s34 = scalar_lea.smem [#allocation4], 1
    %35 = sst [smem:[%s34]] 32
    %s36 = scalar_lea.smem [#allocation4], 2
    %37 = sst [smem:[%s36]] 1
    %39 = dma.general %s18, 3600, %s20, [#allocation2], [#allocation3], [#allocation4], %s30, 0
    %41 = dma.done [#allocation2], 3600
  $region6: #{tpu_custom_call.1} parent=0 // loop_footer
    %s11 = sadd.s32 1, %s7
  $region7: #{tpu_custom_call.1} parent=0 // loop_footer_branch
    %6 = sbr.rel target = $region3
  $region8: #{tpu_custom_call.1} parent=0 // loop_exit
    _
  %42 = vsyncmov [#allocation2]
  %s43 = vpop.sfrf %42
  %p44 = scmp.eq.s32.totalorder %s43, 0
  %p45 = pneg %p44
  %47 = shalt.err (%p45)

</llo_original>
